<compile_context>
chip_gen: v6e
topology: v6e:2x2x1
jax: 0.10.0
libtpu: 0.0.40
codegen_flags: <defaults>
</compile_context>

<pallas_src>
import string

import jax
import jax.numpy as jnp
from jax.experimental import pallas as pl
from jax.experimental.pallas import tpu as pltpu

all_letters = string.ascii_letters + " .,;'"
n_letters = len(all_letters)          # 57

input_size = n_letters                # 57
hidden_size = 128                     # n_hidden in the reference script
output_size = 18                      # n_categories (reference list is empty; use the
                                      # standard 18-language name dataset size)
num_layers = 1


def rnn_seq_kernel(idx_ref,      # SMEM (L,) int32  character indices (scalar prefetch)
                   h0_ref,       # VMEM (1, H)      initial hidden state
                   w_ih_ref,     # VMEM (I, 1, H)   W_ih^T rows (one-hot projection table)
                   w_hh_ref,     # VMEM (H, H)      W_hh^T, resident across all steps
                   b_h_ref,      # VMEM (1, H)      b_ih + b_hh (pre-summed on host)
                   w_lin_ref,    # VMEM (H, O)      W_lin^T
                   b_lin_ref,    # VMEM (1, O)
                   out_ref,      # VMEM (1, O)      final log-softmax (written last step)
                   hn_ref):      # VMEM (1, H)      final hidden; doubles as recurrent carry
    t = pl.program_id(0)

    @pl.when(t == 0)
    def _init():
        hn_ref[...] = h0_ref[...]

    # One-hot input: x_t @ W_ih^T == W_ih^T[char_index]  -> single row gather, no matmul.
    xw = w_ih_ref[idx_ref[t]]                                       # (1, H)
    h = jnp.tanh(xw
                 + jnp.dot(hn_ref[...], w_hh_ref[...],
                           preferred_element_type=jnp.float32)
                 + b_h_ref[...])                                    # (1, H)
    hn_ref[...] = h

    # Classifier head + numerically-stable log-softmax only on the last step.
    @pl.when(t == pl.num_programs(0) - 1)
    def _head():
        logits = (jnp.dot(h, w_lin_ref[...],
                          preferred_element_type=jnp.float32)
                  + b_lin_ref[...])                                 # (1, O)
        m = jnp.max(logits, axis=-1, keepdims=True)
        z = logits - m
        out_ref[...] = z - jnp.log(jnp.sum(jnp.exp(z), axis=-1, keepdims=True))


def rnn_forward_sequence(char_idx, hidden, params):
    """Run the whole character sequence in one pallas_call.

    char_idx: (L,) int32 character indices; hidden: (num_layers=1, 1, H) f32.
    Returns (log_probs (1, 1, O), h_n (1, 1, H)) -- output of the final step, i.e. the
    result of folding the module's forward over the sequence (how the classifier is used).
    """
    L = int(char_idx.shape[0])
    h0 = hidden[0]                                                  # (1, H)
    # Row-gather table for the one-hot projection; leading dim indexed dynamically.
    w_ih_rows = params["w_ih_t"].reshape(input_size, 1, hidden_size)
    b_h = params["b_ih"] + params["b_hh"]                           # pre-summed bias

    const2d = lambda t, idx: (0, 0)
    const3d = lambda t, idx: (0, 0, 0)

    grid_spec = pltpu.PrefetchScalarGridSpec(
        num_scalar_prefetch=1,
        grid=(L,),
        in_specs=[
            pl.BlockSpec((1, hidden_size), const2d),                 # h0
            pl.BlockSpec((input_size, 1, hidden_size), const3d),     # W_ih^T rows (resident)
            pl.BlockSpec((hidden_size, hidden_size), const2d),       # W_hh^T (resident)
            pl.BlockSpec((1, hidden_size), const2d),                 # b_ih + b_hh
            pl.BlockSpec((hidden_size, output_size), const2d),       # W_lin^T (resident)
            pl.BlockSpec((1, output_size), const2d),                 # b_lin
        ],
        out_specs=(
            pl.BlockSpec((1, output_size), const2d),                 # out (written last step)
            pl.BlockSpec((1, hidden_size), const2d),                 # hn (recurrent carry)
        ),
    )

    out, hn = pl.pallas_call(
        rnn_seq_kernel,
        out_shape=(jax.ShapeDtypeStruct((1, output_size), jnp.float32),
                   jax.ShapeDtypeStruct((1, hidden_size), jnp.float32)),
        grid_spec=grid_spec,
        compiler_params=pltpu.CompilerParams(
            dimension_semantics=("arbitrary",)),      # time axis is a serial recurrence
    )(char_idx.astype(jnp.int32), h0,
      w_ih_rows, params["w_hh_t"], b_h, params["w_lin_t"], params["b_lin"])

    # Re-add (seq=1, batch=1) / (num_layers=1, batch=1) leading dims.
    return out[None, ...], hn[None, ...]


def rnn_forward(x, hidden, params):
    """Exact analogue of RNN.forward: x (1, n_letters) one-hot, hidden (1, 1, H)."""
    idx = jnp.argmax(x, axis=-1).astype(jnp.int32)    # recover char index from one-hot
    return rnn_forward_sequence(idx, hidden, params)


def init_params(key):
    """Deterministic init mimicking PyTorch's U(-1/sqrt(H), 1/sqrt(H))."""
    ks = jax.random.split(key, 6)
    bound = 1.0 / jnp.sqrt(jnp.float32(hidden_size))

    def u(k, shape):
        return jax.random.uniform(k, shape, jnp.float32, -bound, bound)

    return {
        # stored transposed relative to PyTorch: (in_features, out_features)
        "w_ih_t": u(ks[0], (input_size, hidden_size)),
        "w_hh_t": u(ks[1], (hidden_size, hidden_size)),
        "b_ih":   u(ks[2], (1, hidden_size)),
        "b_hh":   u(ks[3], (1, hidden_size)),
        "w_lin_t": u(ks[4], (hidden_size, output_size)),
        "b_lin":   u(ks[5], (1, output_size)),
    }


def line_to_indices(line):
    return jnp.array([all_letters.find(c) for c in line], dtype=jnp.int32)


def line_to_tensor(line):
    """JAX equivalent of lineToTensor: (len(line), 1, n_letters) one-hot."""
    return jax.nn.one_hot(line_to_indices(line), n_letters, dtype=jnp.float32)[:, None, :]


def reference_forward_sequence(char_idx, hidden, p):
    """Pure-JAX reference: fold the PyTorch module's forward over the sequence."""
    h = hidden[0]                                                    # (1, H)

    def step(h, ci):
        x = jax.nn.one_hot(ci, input_size, dtype=jnp.float32)[None, :]
        h = jnp.tanh(x @ p["w_ih_t"] + p["b_ih"] + h @ p["w_hh_t"] + p["b_hh"])
        return h, None

    h, _ = jax.lax.scan(step, h, char_idx)
    logits = h @ p["w_lin_t"] + p["b_lin"]
    return jax.nn.log_softmax(logits, axis=-1)[None], h[None]


if __name__ == "__main__":
    key = jax.random.PRNGKey(0)
    params = init_params(key)
    hidden = jnp.zeros((num_layers, 1, hidden_size), jnp.float32)

    # 1) Single-step forward, exactly like the module: x = lineToTensor('B').squeeze(0)
    x = line_to_tensor("B")[0]                                       # (1, 57) one-hot
    out1, hn1 = rnn_forward(x, hidden, params)
    out1 = jax.block_until_ready(out1)
    hn1 = jax.block_until_ready(hn1)
    ref_out1, ref_hn1 = reference_forward_sequence(line_to_indices("B"), hidden, params)
    assert out1.shape == (1, 1, output_size) and hn1.shape == (1, 1, hidden_size)
    assert jnp.allclose(out1, ref_out1, atol=1e-5)
    assert jnp.allclose(hn1, ref_hn1, atol=1e-5)

    # 2) Whole name 'Bai' (seq_len=3) in a single pallas_call with resident weights.
    idx = line_to_indices("Bai")                                     # (3,)
    out2, hn2 = rnn_forward_sequence(idx, hidden, params)
    out2 = jax.block_until_ready(out2)
    hn2 = jax.block_until_ready(hn2)
    ref_out2, ref_hn2 = reference_forward_sequence(idx, hidden, params)
    assert jnp.allclose(out2, ref_out2, atol=1e-5)
    assert jnp.allclose(hn2, ref_hn2, atol=1e-5)

    print("KERNEL_OK")
</pallas_src>

<mosaic_0001>
module attributes {stable_mosaic.version = 11 : i64} {
  func.func @rnn_seq_kernel(%arg0: i32, %arg1: memref<1xi32, #tpu.memory_space<smem>>, %arg2: memref<1x128xf32, #tpu.memory_space<vmem>>, %arg3: memref<57x1x128xf32, #tpu.memory_space<vmem>>, %arg4: memref<128x128xf32, #tpu.memory_space<vmem>>, %arg5: memref<1x128xf32, #tpu.memory_space<vmem>>, %arg6: memref<128x18xf32, #tpu.memory_space<vmem>>, %arg7: memref<1x18xf32, #tpu.memory_space<vmem>>, %arg8: memref<1x18xf32, #tpu.memory_space<vmem>>, %arg9: memref<1x128xf32, #tpu.memory_space<vmem>>) attributes {dimension_semantics = [#tpu.dimension_semantics<arbitrary>], iteration_bounds = array<i64: 1>, scalar_prefetch = 1 : i64, scratch_operands = 0 : i64, tpu.core_type = #tpu.core_type<tc>, window_params = [{pipeline_mode = #tpu.pipeline_mode<synchronous>, transform_indices = @transform_0, window_bounds = array<i64: 1, 128>}, {pipeline_mode = #tpu.pipeline_mode<synchronous>, transform_indices = @transform_1, window_bounds = array<i64: 57, 1, 128>}, {pipeline_mode = #tpu.pipeline_mode<synchronous>, transform_indices = @transform_2, window_bounds = array<i64: 128, 128>}, {pipeline_mode = #tpu.pipeline_mode<synchronous>, transform_indices = @transform_3, window_bounds = array<i64: 1, 128>}, {pipeline_mode = #tpu.pipeline_mode<synchronous>, transform_indices = @transform_4, window_bounds = array<i64: 128, 18>}, {pipeline_mode = #tpu.pipeline_mode<synchronous>, transform_indices = @transform_5, window_bounds = array<i64: 1, 18>}, {pipeline_mode = #tpu.pipeline_mode<synchronous>, transform_indices = @transform_6, window_bounds = array<i64: 1, 18>}, {pipeline_mode = #tpu.pipeline_mode<synchronous>, transform_indices = @transform_7, window_bounds = array<i64: 1, 128>}]} {
    %c0_i32 = arith.constant 0 : i32
    %0 = arith.cmpi eq, %arg0, %c0_i32 : i32
    %1 = arith.extui %0 : i1 to i32
    %c0_i32_0 = arith.constant 0 : i32
    %2 = arith.cmpi ne, %1, %c0_i32_0 : i32
    scf.if %2 {
      %c0_12 = arith.constant 0 : index
      %c0_13 = arith.constant 0 : index
      %19 = vector.load %arg2[%c0_12, %c0_13] : memref<1x128xf32, #tpu.memory_space<vmem>>, vector<1x128xf32>
      %c0_14 = arith.constant 0 : index
      %c0_15 = arith.constant 0 : index
      %20 = vector.load %arg9[%c0_14, %c0_15] : memref<1x128xf32, #tpu.memory_space<vmem>>, vector<1x128xf32>
      tpu.vector_store %arg9[%c0_14, %c0_15], %19 {strides = array<i32>} : memref<1x128xf32, #tpu.memory_space<vmem>>, vector<1x128xf32>,
    } else {
    }
    %3 = arith.index_cast %arg0 : i32 to index
    %4 = memref.load %arg1[%3] : memref<1xi32, #tpu.memory_space<smem>>
    %5 = arith.index_cast %4 : i32 to index
    %c0 = arith.constant 0 : index
    %c0_1 = arith.constant 0 : index
    %6 = vector.load %arg3[%5, %c0, %c0_1] : memref<57x1x128xf32, #tpu.memory_space<vmem>>, vector<1x1x128xf32>
    %7 = vector.shape_cast %6 : vector<1x1x128xf32> to vector<1x128xf32>
    %c0_2 = arith.constant 0 : index
    %c0_3 = arith.constant 0 : index
    %8 = vector.load %arg9[%c0_2, %c0_3] : memref<1x128xf32, #tpu.memory_space<vmem>>, vector<1x128xf32>
    %c0_4 = arith.constant 0 : index
    %c0_5 = arith.constant 0 : index
    %9 = vector.load %arg4[%c0_4, %c0_5] : memref<128x128xf32, #tpu.memory_space<vmem>>, vector<128x128xf32>
    %cst = arith.constant dense<0.000000e+00> : vector<1x128xf32>
    %10 = tpu.matmul %8, %9, %cst {dimension_numbers = #tpu.dot_dimension_numbers<[1], [0], [0], [1], [0, 0, 1, 1], [], []>} : vector<1x128xf32>, vector<128x128xf32>, vector<1x128xf32> -> vector<1x128xf32>
    %11 = arith.addf %7, %10 : vector<1x128xf32>
    %c0_6 = arith.constant 0 : index
    %c0_7 = arith.constant 0 : index
    %12 = vector.load %arg5[%c0_6, %c0_7] : memref<1x128xf32, #tpu.memory_space<vmem>>, vector<1x128xf32>
    %13 = arith.addf %11, %12 : vector<1x128xf32>
    %14 = math.tanh %13 : vector<1x128xf32>
    %c0_8 = arith.constant 0 : index
    %c0_9 = arith.constant 0 : index
    %15 = vector.load %arg9[%c0_8, %c0_9] : memref<1x128xf32, #tpu.memory_space<vmem>>, vector<1x128xf32>
    tpu.vector_store %arg9[%c0_8, %c0_9], %14 {strides = array<i32>} : memref<1x128xf32, #tpu.memory_space<vmem>>, vector<1x128xf32>,
    %c0_i32_10 = arith.constant 0 : i32
    %16 = arith.cmpi eq, %arg0, %c0_i32_10 : i32
    %17 = arith.extui %16 : i1 to i32
    %c0_i32_11 = arith.constant 0 : i32
    %18 = arith.cmpi ne, %17, %c0_i32_11 : i32
    scf.if %18 {
      %c0_12 = arith.constant 0 : index
      %c0_13 = arith.constant 0 : index
      %19 = vector.load %arg6[%c0_12, %c0_13] : memref<128x18xf32, #tpu.memory_space<vmem>>, vector<128x18xf32>
      %cst_14 = arith.constant dense<0.000000e+00> : vector<1x18xf32>
      %20 = tpu.matmul %14, %19, %cst_14 {dimension_numbers = #tpu.dot_dimension_numbers<[1], [0], [0], [1], [0, 0, 1, 1], [], []>} : vector<1x128xf32>, vector<128x18xf32>, vector<1x18xf32> -> vector<1x18xf32>
      %c0_15 = arith.constant 0 : index
      %c0_16 = arith.constant 0 : index
      %21 = vector.load %arg7[%c0_15, %c0_16] : memref<1x18xf32, #tpu.memory_space<vmem>>, vector<1x18xf32>
      %22 = arith.addf %20, %21 : vector<1x18xf32>
      %cst_17 = arith.constant dense<0xFF800000> : vector<1xf32>
      %23 = vector.multi_reduction <maximumf>, %22, %cst_17 [1] : vector<1x18xf32> to vector<1xf32>
      %24 = vector.shape_cast %23 : vector<1xf32> to vector<1x1xf32>
      %25 = vector.broadcast %24 : vector<1x1xf32> to vector<1x18xf32>
      %26 = arith.subf %22, %25 : vector<1x18xf32>
      %27 = math.exp %26 : vector<1x18xf32>
      %cst_18 = arith.constant dense<0.000000e+00> : vector<1xf32>
      %28 = vector.multi_reduction <add>, %27, %cst_18 [1] : vector<1x18xf32> to vector<1xf32>
      %29 = vector.shape_cast %28 : vector<1xf32> to vector<1x1xf32>
      %30 = math.log %29 : vector<1x1xf32>
      %31 = vector.broadcast %30 : vector<1x1xf32> to vector<1x18xf32>
      %32 = arith.subf %26, %31 : vector<1x18xf32>
      %c0_19 = arith.constant 0 : index
      %c0_20 = arith.constant 0 : index
      %33 = vector.load %arg8[%c0_19, %c0_20] : memref<1x18xf32, #tpu.memory_space<vmem>>, vector<1x18xf32>
      tpu.vector_store %arg8[%c0_19, %c0_20], %32 {strides = array<i32>} : memref<1x18xf32, #tpu.memory_space<vmem>>, vector<1x18xf32>,
    } else {
    }
    return
  }
  func.func @transform_0(%arg0: i32, %arg1: memref<1xi32, #tpu.memory_space<smem>>) -> (i32, i32) {
    %c0_i32 = arith.constant 0 : i32
    %c0_i32_0 = arith.constant 0 : i32
    %c0_i32_1 = arith.constant 0 : i32
    return %c0_i32, %c0_i32_0 : i32, i32
  }
  func.func @transform_1(%arg0: i32, %arg1: memref<1xi32, #tpu.memory_space<smem>>) -> (i32, i32, i32) {
    %c0_i32 = arith.constant 0 : i32
    %c0_i32_0 = arith.constant 0 : i32
    %c0_i32_1 = arith.constant 0 : i32
    %c0_i32_2 = arith.constant 0 : i32
    return %c0_i32, %c0_i32_0, %c0_i32_1 : i32, i32, i32
  }
  func.func @transform_2(%arg0: i32, %arg1: memref<1xi32, #tpu.memory_space<smem>>) -> (i32, i32) {
    %c0_i32 = arith.constant 0 : i32
    %c0_i32_0 = arith.constant 0 : i32
    %c0_i32_1 = arith.constant 0 : i32
    return %c0_i32, %c0_i32_0 : i32, i32
  }
  func.func @transform_3(%arg0: i32, %arg1: memref<1xi32, #tpu.memory_space<smem>>) -> (i32, i32) {
    %c0_i32 = arith.constant 0 : i32
    %c0_i32_0 = arith.constant 0 : i32
    %c0_i32_1 = arith.constant 0 : i32
    return %c0_i32, %c0_i32_0 : i32, i32
  }
  func.func @transform_4(%arg0: i32, %arg1: memref<1xi32, #tpu.memory_space<smem>>) -> (i32, i32) {
    %c0_i32 = arith.constant 0 : i32
    %c0_i32_0 = arith.constant 0 : i32
    %c0_i32_1 = arith.constant 0 : i32
    return %c0_i32, %c0_i32_0 : i32, i32
  }
  func.func @transform_5(%arg0: i32, %arg1: memref<1xi32, #tpu.memory_space<smem>>) -> (i32, i32) {
    %c0_i32 = arith.constant 0 : i32
    %c0_i32_0 = arith.constant 0 : i32
    %c0_i32_1 = arith.constant 0 : i32
    return %c0_i32, %c0_i32_0 : i32, i32
  }
  func.func @transform_6(%arg0: i32, %arg1: memref<1xi32, #tpu.memory_space<smem>>) -> (i32, i32) {
    %c0_i32 = arith.constant 0 : i32
    %c0_i32_0 = arith.constant 0 : i32
    %c0_i32_1 = arith.constant 0 : i32
    return %c0_i32, %c0_i32_0 : i32, i32
  }
  func.func @transform_7(%arg0: i32, %arg1: memref<1xi32, #tpu.memory_space<smem>>) -> (i32, i32) {
    %c0_i32 = arith.constant 0 : i32
    %c0_i32_0 = arith.constant 0 : i32
    %c0_i32_1 = arith.constant 0 : i32
    return %c0_i32, %c0_i32_0 : i32, i32
  }
}

</mosaic_0001>

<llo_original>
// kernel: tpu_custom_call.1
$region0: #{tpu_custom_call.1}
  #allocation0 [shape = 'u32[]', space=smem, size = 0x4, offset = 0x4, fixed_abs, tag = 'smem constant byte address 0x4 - core index']
  #allocation1 [shape = 'u32[144,128]{1,0:T(1,128)}', space=vmem, size = 0x12000, scoped, tag = 'internal scratch']
  #allocation2 [shape = 's32[1]{0}', space=sflag, size = 0x4, scoped, tag = 'scoped memory for tpu_custom_call.1']
  #allocation3 [shape = 's32[1]{0:T(128)S(6)}', space=smem, size = 0x200, scoped, tag = 'prefetched SMEM operand 0']
  %s0 = inlined_call_operand.<no memory space> [shape: s32[1], index: 0, kind: input, shape index: {}]
  %s1 = inlined_call_operand.vmem [shape: f32[1,128], index: 1, kind: input, shape index: {}]
  %s2 = inlined_call_operand.hbm [shape: f32[57,1,128], index: 2, kind: input, shape index: {}]
  %s3 = inlined_call_operand.vmem [shape: f32[128,128], index: 3, kind: input, shape index: {}]
  %s4 = inlined_call_operand.vmem [shape: f32[1,128], index: 4, kind: input, shape index: {}]
  %s5 = inlined_call_operand.vmem [shape: f32[128,18], index: 5, kind: input, shape index: {}]
  %s6 = inlined_call_operand.vmem [shape: f32[1,18], index: 6, kind: input, shape index: {}]
  %s7 = inlined_call_operand.hbm [shape: f32[1,18], index: 7, kind: output, shape index: {0}]
  %s8 = inlined_call_operand.hbm [shape: f32[1,128], index: 8, kind: output, shape index: {1}]
  %9 = xla_tuple %s7, %s8
  %s10 = sld [smem:[#allocation0]]
  $region54: #{tpu_custom_call.1} parent=0
    _
  %s12 = ssub.s32 1, %s10
  %s13 = scalar_select 0, %s12, %s10
  %14 = sst [smem:[#allocation3]] %s0
  $region1: #{tpu_custom_call.1} parent=0
    #allocation4 [shape = 'u8[29184]{0}', space=vmem, size = 0x7400, scoped, tag = 'input window, operand 2, single buffered']
    #allocation5 [shape = 's32[1]{0}', space=sflag, size = 0x4, scoped, tag = 'scoped memory for tpu_custom_call.1']
    #allocation6 [shape = 's32[1]{0}', space=sflag, size = 0x4, scoped, tag = 'scoped memory for tpu_custom_call.1']
    #allocation7 [shape = 'u8[512]{0}', space=vmem, size = 0x400, scoped, tag = 'output window, operand 0, single buffered']
    #allocation8 [shape = 'u8[512]{0}', space=vmem, size = 0x400, scoped, tag = 'output window, operand 1, single buffered']
    #allocation9 [shape = 's32[1]{0}', space=sflag, size = 0x4, scoped, tag = 'scoped memory for tpu_custom_call.1']
    %15 = vsyncpa [#allocation5], 0
    %16 = vsyncpa [#allocation6], 0
    %17 = vsyncpa [#allocation9], 0
    // Predicated region
    $region2: #{tpu_custom_call.1} parent=1 // pred_check
      _
    $region3: #{tpu_custom_call.1} parent=1 // pred_check_branch
      %19 = sbr.rel (0) target = $region5
    $region4: #{tpu_custom_call.1} parent=1 // pred_region
      _
    $region5: #{tpu_custom_call.1} parent=1 // pred_fallthru
      _
    // Predicated region
    $region6: #{tpu_custom_call.1} parent=1 // pred_check
      _
    $region7: #{tpu_custom_call.1} parent=1 // pred_check_branch
      %21 = sbr.rel (0) target = $region9
    $region8: #{tpu_custom_call.1} parent=1 // pred_region
      %s23 = ssub.s32 912, 912
      %24 = vsyncadd [#allocation5], %s23
      %s25 = sshll.u32 [#allocation4], 4
      %s26 = int_to_ptr.vmem [resolvable:$true] %s25
      %31 = dma.hbm_to_vmem [thread:$0]  %s2, 912, %s26, [#allocation5], 16, 16, 1
    $region9: #{tpu_custom_call.1} parent=1 // pred_fallthru
      _
    // Predicated region
    $region10: #{tpu_custom_call.1} parent=1 // pred_check
      _
    $region11: #{tpu_custom_call.1} parent=1 // pred_check_branch
      %33 = sbr.rel (0) target = $region13
    $region12: #{tpu_custom_call.1} parent=1 // pred_region
      _
    $region13: #{tpu_custom_call.1} parent=1 // pred_fallthru
      _
    // Predicated region
    $region14: #{tpu_custom_call.1} parent=1 // pred_check
      _
    $region15: #{tpu_custom_call.1} parent=1 // pred_check_branch
      %35 = sbr.rel (0) target = $region17
    $region16: #{tpu_custom_call.1} parent=1 // pred_region
      _
    $region17: #{tpu_custom_call.1} parent=1 // pred_fallthru
      _
    // Predicated region
    $region18: #{tpu_custom_call.1} parent=1 // pred_check
      _
    $region19: #{tpu_custom_call.1} parent=1 // pred_check_branch
      %37 = sbr.rel (0) target = $region21
    $region20: #{tpu_custom_call.1} parent=1 // pred_region
      _
    $region21: #{tpu_custom_call.1} parent=1 // pred_fallthru
      _
    // Predicated region
    $region22: #{tpu_custom_call.1} parent=1 // pred_check
      _
    $region23: #{tpu_custom_call.1} parent=1 // pred_check_branch
      %39 = sbr.rel (0) target = $region25
    $region24: #{tpu_custom_call.1} parent=1 // pred_region
      _
    $region25: #{tpu_custom_call.1} parent=1 // pred_fallthru
      _
    // Predicated region
    $region26: #{tpu_custom_call.1} parent=1 // pred_check
      _
    $region27: #{tpu_custom_call.1} parent=1 // pred_check_branch
      %41 = sbr.rel (0) target = $region29
    $region28: #{tpu_custom_call.1} parent=1 // pred_region
      %42 = dma.done [#allocation5], 912
    $region29: #{tpu_custom_call.1} parent=1 // pred_fallthru
      _
    %p43 = scmp.eq.s32.totalorder 0, 0
    // Predicated region
    $region30: #{tpu_custom_call.1} parent=1 // pred_check
      %p44 = pneg %p43
    $region31: #{tpu_custom_call.1} parent=1 // pred_check_branch
      %46 = sbr.rel (%p44) target = $region33
    $region32: #{tpu_custom_call.1} parent=1 // pred_region
      %v47 = vld [vmem:[%s1] sm:$0x1]
      %48 = vst [vmem:[#allocation8] sm:$0x1] %v47
    $region33: #{tpu_custom_call.1} parent=1 // pred_fallthru
      _
    %s49 = sld [smem:[#allocation3]]
    %s50 = scalar_lea.vmem [#allocation4], %s49
    %v51 = vld [vmem:[%s50] sm:$0x1]
    %v52 = vld [vmem:[#allocation8] sm:$0x1]
    %v53 = vld [vmem:[%s3] sm:$0xff]
    %v54 = vld [vmem:[%s3 + $0x8] sm:$0xff]
    %v55 = vld [vmem:[%s3 + $0x10] sm:$0xff]
    %v56 = vld [vmem:[%s3 + $0x18] sm:$0xff]
    %v57 = vld [vmem:[%s3 + $0x20] sm:$0xff]
    %v58 = vld [vmem:[%s3 + $0x28] sm:$0xff]
    %v59 = vld [vmem:[%s3 + $0x30] sm:$0xff]
    %v60 = vld [vmem:[%s3 + $0x38] sm:$0xff]
    %v61 = vld [vmem:[%s3 + $0x40] sm:$0xff]
    %v62 = vld [vmem:[%s3 + $0x48] sm:$0xff]
    %v63 = vld [vmem:[%s3 + $0x50] sm:$0xff]
    %v64 = vld [vmem:[%s3 + $0x58] sm:$0xff]
    %v65 = vld [vmem:[%s3 + $0x60] sm:$0xff]
    %v66 = vld [vmem:[%s3 + $0x68] sm:$0xff]
    %v67 = vld [vmem:[%s3 + $0x70] sm:$0xff]
    %v68 = vld [vmem:[%s3 + $0x78] sm:$0xff]
    %69 = vmatprep.subr.mxu0 0.0
    %70 = vmatpush1.msra.mxu0 %v68
    %71 = vmatprep.subr.mxu0 0.0
    %72 = vmatpush1.msra.mxu0 %v67
    %73 = vmatprep.subr.mxu0 0.0
    %74 = vmatpush1.msra.mxu0 %v66
    %75 = vmatprep.subr.mxu0 0.0
    %76 = vmatpush1.msra.mxu0 %v65
    %77 = vmatprep.subr.mxu0 0.0
    %78 = vmatpush1.msra.mxu0 %v64
    %79 = vmatprep.subr.mxu0 0.0
    %80 = vmatpush1.msra.mxu0 %v63
    %81 = vmatprep.subr.mxu0 0.0
    %82 = vmatpush1.msra.mxu0 %v62
    %83 = vmatprep.subr.mxu0 0.0
    %84 = vmatpush1.msra.mxu0 %v61
    %85 = vmatprep.subr.mxu0 0.0
    %86 = vmatpush1.msra.mxu0 %v60
    %87 = vmatprep.subr.mxu0 0.0
    %88 = vmatpush1.msra.mxu0 %v59
    %89 = vmatprep.subr.mxu0 0.0
    %90 = vmatpush1.msra.mxu0 %v58
    %91 = vmatprep.subr.mxu0 0.0
    %92 = vmatpush1.msra.mxu0 %v57
    %93 = vmatprep.subr.mxu0 0.0
    %94 = vmatpush1.msra.mxu0 %v56
    %95 = vmatprep.subr.mxu0 0.0
    %96 = vmatpush1.msra.mxu0 %v55
    %97 = vmatprep.subr.mxu0 0.0
    %98 = vmatpush1.msra.mxu0 %v54
    %99 = vmatprep.subr.mxu0 0.0
    %100 = vmatpush1.msra.mxu0 %v53
    %101 = vmatprep.subr.mxu0 0.0
    %102 = vmatpush2.msra.mxu0 0.0
    %103 = vmatprep.subr.mxu0 0.0
    %104 = vmatpush2.msra.mxu0 0.0
    %105 = vmatprep.subr.mxu0 0.0
    %106 = vmatpush2.msra.mxu0 0.0
    %107 = vmatprep.subr.mxu0 0.0
    %108 = vmatpush2.msra.mxu0 0.0
    %109 = vmatprep.subr.mxu0 0.0
    %110 = vmatpush2.msra.mxu0 0.0
    %111 = vmatprep.subr.mxu0 0.0
    %112 = vmatpush2.msra.mxu0 0.0
    %113 = vmatprep.subr.mxu0 0.0
    %114 = vmatpush2.msra.mxu0 0.0
    %115 = vmatprep.subr.mxu0 0.0
    %116 = vmatpush2.msra.mxu0 0.0
    %117 = vmatprep.subr.mxu0 0.0
    %118 = vmatpush2.msra.mxu0 0.0
    %119 = vmatprep.subr.mxu0 0.0
    %120 = vmatpush2.msra.mxu0 0.0
    %121 = vmatprep.subr.mxu0 0.0
    %122 = vmatpush2.msra.mxu0 0.0
    %123 = vmatprep.subr.mxu0 0.0
    %124 = vmatpush2.msra.mxu0 0.0
    %125 = vmatprep.subr.mxu0 0.0
    %126 = vmatpush2.msra.mxu0 0.0
    %127 = vmatprep.subr.mxu0 0.0
    %128 = vmatpush2.msra.mxu0 0.0
    %129 = vmatprep.subr.mxu0 0.0
    %130 = vmatpush2.msra.mxu0 0.0
    %131 = vmatprep.subr.mxu0 0.0
    %132 = vmatpush2.msra.mxu0 0.0
    %133 = vmatprep.mubr.f32.mxu0 0.0
    %134 = vmatmul.mubr.f32.gmra.mxu0 %v52
    %v135 = vpop.f32.mrf.mxu0
    %v136 = vadd.f32 0.0, %v135
    %v137 = vpop.f32.mrf.mxu0
    %138 = vdwg.mxu0
    %v139 = vadd.f32 %v51, %v136
    %v140 = vld [vmem:[%s4] sm:$0x1]
    %v141 = vadd.f32 %v139, %v140
    %v142 = vtanh.pop %v141
    %143 = vst [vmem:[#allocation8] sm:$0x1] %v142
    // Predicated region
    $region34: #{tpu_custom_call.1} parent=1 // pred_check
      %p144 = pneg %p43
    $region35: #{tpu_custom_call.1} parent=1 // pred_check_branch
      %146 = sbr.rel (%p144) target = $region37
    $region36: #{tpu_custom_call.1} parent=1 // pred_region
      %v147 = vld [vmem:[%s5] sm:$0xff]
      %v148 = vld [vmem:[%s5 + $0x8] sm:$0xff]
      %v149 = vld [vmem:[%s5 + $0x10] sm:$0xff]
      %v150 = vld [vmem:[%s5 + $0x18] sm:$0xff]
      %v151 = vld [vmem:[%s5 + $0x20] sm:$0xff]
      %v152 = vld [vmem:[%s5 + $0x28] sm:$0xff]
      %v153 = vld [vmem:[%s5 + $0x30] sm:$0xff]
      %v154 = vld [vmem:[%s5 + $0x38] sm:$0xff]
      %v155 = vld [vmem:[%s5 + $0x40] sm:$0xff]
      %v156 = vld [vmem:[%s5 + $0x48] sm:$0xff]
      %v157 = vld [vmem:[%s5 + $0x50] sm:$0xff]
      %v158 = vld [vmem:[%s5 + $0x58] sm:$0xff]
      %v159 = vld [vmem:[%s5 + $0x60] sm:$0xff]
      %v160 = vld [vmem:[%s5 + $0x68] sm:$0xff]
      %v161 = vld [vmem:[%s5 + $0x70] sm:$0xff]
      %v162 = vld [vmem:[%s5 + $0x78] sm:$0xff]
      %v163 = vld [vmem:[%s6] sm:$0x1]
      %164 = vmatprep.subr.mxu0 0.0
      %165 = vmatpush1.msra.mxu0 %v162
      %166 = vmatprep.subr.mxu0 0.0
      %167 = vmatpush1.msra.mxu0 %v161
      %168 = vmatprep.subr.mxu0 0.0
      %169 = vmatpush1.msra.mxu0 %v160
      %170 = vmatprep.subr.mxu0 0.0
      %171 = vmatpush1.msra.mxu0 %v159
      %172 = vmatprep.subr.mxu0 0.0
      %173 = vmatpush1.msra.mxu0 %v158
      %174 = vmatprep.subr.mxu0 0.0
      %175 = vmatpush1.msra.mxu0 %v157
      %176 = vmatprep.subr.mxu0 0.0
      %177 = vmatpush1.msra.mxu0 %v156
      %178 = vmatprep.subr.mxu0 0.0
      %179 = vmatpush1.msra.mxu0 %v155
      %180 = vmatprep.subr.mxu0 0.0
      %181 = vmatpush1.msra.mxu0 %v154
      %182 = vmatprep.subr.mxu0 0.0
      %183 = vmatpush1.msra.mxu0 %v153
      %184 = vmatprep.subr.mxu0 0.0
      %185 = vmatpush1.msra.mxu0 %v152
      %186 = vmatprep.subr.mxu0 0.0
      %187 = vmatpush1.msra.mxu0 %v151
      %188 = vmatprep.subr.mxu0 0.0
      %189 = vmatpush1.msra.mxu0 %v150
      %190 = vmatprep.subr.mxu0 0.0
      %191 = vmatpush1.msra.mxu0 %v149
      %192 = vmatprep.subr.mxu0 0.0
      %193 = vmatpush1.msra.mxu0 %v148
      %194 = vmatprep.subr.mxu0 0.0
      %195 = vmatpush1.msra.mxu0 %v147
      %196 = vmatprep.subr.mxu0 0.0
      %197 = vmatpush2.msra.mxu0 0.0
      %198 = vmatprep.subr.mxu0 0.0
      %199 = vmatpush2.msra.mxu0 0.0
      %200 = vmatprep.subr.mxu0 0.0
      %201 = vmatpush2.msra.mxu0 0.0
      %202 = vmatprep.subr.mxu0 0.0
      %203 = vmatpush2.msra.mxu0 0.0
      %204 = vmatprep.subr.mxu0 0.0
      %205 = vmatpush2.msra.mxu0 0.0
      %206 = vmatprep.subr.mxu0 0.0
      %207 = vmatpush2.msra.mxu0 0.0
      %208 = vmatprep.subr.mxu0 0.0
      %209 = vmatpush2.msra.mxu0 0.0
      %210 = vmatprep.subr.mxu0 0.0
      %211 = vmatpush2.msra.mxu0 0.0
      %212 = vmatprep.subr.mxu0 0.0
      %213 = vmatpush2.msra.mxu0 0.0
      %214 = vmatprep.subr.mxu0 0.0
      %215 = vmatpush2.msra.mxu0 0.0
      %216 = vmatprep.subr.mxu0 0.0
      %217 = vmatpush2.msra.mxu0 0.0
      %218 = vmatprep.subr.mxu0 0.0
      %219 = vmatpush2.msra.mxu0 0.0
      %220 = vmatprep.subr.mxu0 0.0
      %221 = vmatpush2.msra.mxu0 0.0
      %222 = vmatprep.subr.mxu0 0.0
      %223 = vmatpush2.msra.mxu0 0.0
      %224 = vmatprep.subr.mxu0 0.0
      %225 = vmatpush2.msra.mxu0 0.0
      %226 = vmatprep.subr.mxu0 0.0
      %227 = vmatpush2.msra.mxu0 0.0
      %228 = vmatprep.mubr.f32.mxu0 0.0
      %229 = vmatmul.mubr.f32.gmra.mxu0 %v142
      %v230 = vpop.f32.mrf.mxu0
      %v231 = vadd.f32 %v163, %v230
      %v232 = vpop.f32.mrf.mxu0
      %233 = vdwg.mxu0
      %vm234 = vcmask 139264
      %v235 = vsel %vm234, %v231, -inf
      %236 = vmax.xlane.f32.xlu0 %v235
      %v237 = vpop.xlane.xlu0 %236
      %v238 = vsub.f32 %v231, %v237
      %v239 = vmul.f32 %v238, 1.442695
      %v240 = vpow.pop %v239
      %v241 = vsel %vm234, %v240, 0.0
      %242 = vadd.xlane.f32.xlu0 %v241
      %v243 = vpop.xlane.xlu0 %242
      %v244 = vlog2.pop %v243
      %v245 = vmul.f32 %v244, 0.6931472
      %v246 = vsub.f32 %v238, %v245
      %247 = vst.msk [vmem:[#allocation7] sm:$0x1] %vm234, %v246
    $region37: #{tpu_custom_call.1} parent=1 // pred_fallthru
      _
    // Predicated region
    $region38: #{tpu_custom_call.1} parent=1 // pred_check
      _
    $region39: #{tpu_custom_call.1} parent=1 // pred_check_branch
      %249 = sbr.rel (0) target = $region41
    $region40: #{tpu_custom_call.1} parent=1 // pred_region
      %s251 = ssub.s32 16, 16
      %252 = vsyncadd [#allocation6], %s251
      %s254 = sshll.u32 [#allocation7], 4
      %s255 = int_to_ptr.vmem [resolvable:$true] %s254
      %257 = dma.vmem_to_hbm [thread:$0]  %s255, 16, %s7, [#allocation6]
    $region41: #{tpu_custom_call.1} parent=1 // pred_fallthru
      _
    // Predicated region
    $region42: #{tpu_custom_call.1} parent=1 // pred_check
      _
    $region43: #{tpu_custom_call.1} parent=1 // pred_check_branch
      %259 = sbr.rel (0) target = $region45
    $region44: #{tpu_custom_call.1} parent=1 // pred_region
      %s261 = ssub.s32 16, 16
      %262 = vsyncadd [#allocation9], %s261
      %s264 = sshll.u32 [#allocation8], 4
      %s265 = int_to_ptr.vmem [resolvable:$true] %s264
      %267 = dma.vmem_to_hbm [thread:$0]  %s265, 16, %s8, [#allocation9]
    $region45: #{tpu_custom_call.1} parent=1 // pred_fallthru
      _
    // Predicated region
    $region46: #{tpu_custom_call.1} parent=1 // pred_check
      _
    $region47: #{tpu_custom_call.1} parent=1 // pred_check_branch
      %269 = sbr.rel (0) target = $region49
    $region48: #{tpu_custom_call.1} parent=1 // pred_region
      %270 = dma.done [#allocation6], 16
    $region49: #{tpu_custom_call.1} parent=1 // pred_fallthru
      _
    // Predicated region
    $region50: #{tpu_custom_call.1} parent=1 // pred_check
      _
    $region51: #{tpu_custom_call.1} parent=1 // pred_check_branch
      %272 = sbr.rel (0) target = $region53
    $region52: #{tpu_custom_call.1} parent=1 // pred_region
      %273 = dma.done [#allocation9], 16
    $region53: #{tpu_custom_call.1} parent=1 // pred_fallthru
      _
    %274 = vsyncpa [#allocation5], 1
    %275 = vsyncpa [#allocation6], 1
    %276 = vsyncpa [#allocation9], 1

</llo_original>
